<compile_context>
chip_gen: v7x
topology: tpu7x:2x2x1
jax: 0.10.0
libtpu: 0.0.40
codegen_flags: <defaults>
</compile_context>

<pallas_src>
import jax
import jax.numpy as jnp
from jax.experimental import pallas as pl
from jax.experimental.pallas import tpu as pltpu


def _round_up(x, m):
    return (x + m - 1) // m * m


def _make_loss_kernel(tm, m_rows, inner, needs_mask):
    def kernel(truth_ref, pred_ref, acc_ref):
        # The accumulator block is revisited across the inner (reduction) axis.
        @pl.when(pl.program_id(1) == 0)
        def _():
            acc_ref[...] = jnp.zeros_like(acc_ref)

        d = truth_ref[...].astype(jnp.float32) - pred_ref[...].astype(jnp.float32)
        # Fused per-element MSE + MAE contribution (split by B*T in the wrapper).
        val = d * d + jnp.abs(d)

        if needs_mask:
            # Zero rows belonging to the partial last block or to clamped
            # duplicate blocks (logical block index past the array extent).
            j = pl.program_id(0) * inner + pl.program_id(1)
            rows = j * tm + jax.lax.broadcasted_iota(jnp.int32, (tm, 1), 0)
            val = jnp.where(rows < m_rows, val, 0.0)

        acc_ref[...] += val

    return kernel


def forecasting_loss(truth, pred, decouple_loss=None, *, model_name="",
                     decouple_loss_weight=0.0, target_block_bytes=2 << 20):
    """Pallas implementation of Loss.forward.

    truth, pred : (B, T, C, H, W)
    Returns scalar float32: mean(sum(d^2, CHW)) + mean(sum(|d|, CHW))
    (+ optional PredRNN-V2 decouple term).
    """
    assert truth.shape == pred.shape and truth.ndim == 5, (truth.shape, pred.shape)
    B, T, C, H, W = truth.shape
    BT, M, HW = B * T, B * T * C, H * W

    # Free (contiguous) reshape to a dense 2-D layout: rows x lane axis.
    t2 = truth.reshape(M, HW)
    p2 = pred.reshape(M, HW)

    itemsize = jnp.dtype(truth.dtype).itemsize
    # Row-block size: multiple of 8 sublanes, sized so one input block is
    # roughly target_block_bytes, capped by the (rounded-up) array extent.
    tm = max(8, (target_block_bytes // (HW * itemsize)) // 8 * 8)
    tm = min(tm, _round_up(M, 8))
    nb = pl.cdiv(M, tm)                 # number of logical row blocks
    nparts = 2 if nb >= 2 else 1        # independent accumulator partitions (v7x TCs)
    inner = pl.cdiv(nb, nparts)
    needs_mask = (M % tm != 0) or (nparts * inner != nb)

    def in_map(p, i):
        # Clamp so no DMA ever targets a fully out-of-bounds block; the
        # in-kernel mask zeroes duplicated / partial rows.
        return (jnp.minimum(p * inner + i, nb - 1), 0)

    acc = pl.pallas_call(
        _make_loss_kernel(tm, M, inner, needs_mask),
        out_shape=jax.ShapeDtypeStruct((nparts * tm, HW), jnp.float32),
        grid=(nparts, inner),
        in_specs=[pl.BlockSpec((tm, HW), in_map),
                  pl.BlockSpec((tm, HW), in_map)],
        out_specs=pl.BlockSpec((tm, HW), lambda p, i: (p, 0)),
        compiler_params=pltpu.CompilerParams(
            dimension_semantics=("parallel", "arbitrary"),
            vmem_limit_bytes=32 * 1024 * 1024),
    )(t2, p2)

    # mean-of-per-(B,T)-sums == total_sum / (B*T); MSE+MAE fused per element.
    loss = jnp.sum(acc) / jnp.float32(BT)

    if "PredRNN-V2" in model_name and decouple_loss is not None:
        # TODO(synk): config-gated decouple-loss term is a tiny reduction;
        # kept in plain JAX rather than a dedicated Pallas kernel.
        dl = jnp.sum(decouple_loss.astype(jnp.float32), axis=(1, 3))
        loss = loss + jnp.float32(decouple_loss_weight) * jnp.mean(dl)

    return loss


def _reference(truth, pred, decouple_loss=None, model_name="",
               decouple_loss_weight=0.0):
    d = truth.astype(jnp.float32) - pred.astype(jnp.float32)
    mse = jnp.mean(jnp.sum(d ** 2, axis=(2, 3, 4)))
    mae = jnp.mean(jnp.sum(jnp.abs(d), axis=(2, 3, 4)))
    loss = mse + mae
    if "PredRNN-V2" in model_name and decouple_loss is not None:
        dl = jnp.sum(decouple_loss, axis=(1, 3))
        loss = loss + decouple_loss_weight * jnp.mean(dl)
    return loss


if __name__ == "__main__":
    key = jax.random.PRNGKey(0)
    B, T, C, H, W = 2, 4, 3, 16, 16
    k1, k2, k3 = jax.random.split(key, 3)
    truth = jax.random.normal(k1, (B, T, C, H, W), dtype=jnp.float32)
    pred = jax.random.normal(k2, (B, T, C, H, W), dtype=jnp.float32)
    decouple = jax.random.normal(k3, (B, T, 8, 32), dtype=jnp.float32)

    # 1) Default path (no PredRNN-V2 branch), large-tile config.
    out = jax.block_until_ready(forecasting_loss(truth, pred))
    ref = _reference(truth, pred)
    assert jnp.allclose(out, ref, rtol=1e-5, atol=1e-3), (out, ref)

    # 2) Tiny-tile config to exercise the multi-block / masked-tail /
    #    two-partition accumulator path.
    out2 = jax.block_until_ready(
        forecasting_loss(truth, pred, target_block_bytes=8 * H * W * 4))
    assert jnp.allclose(out2, ref, rtol=1e-5, atol=1e-3), (out2, ref)

    # 3) PredRNN-V2 branch (decouple loss term handled in plain JAX).
    out3 = jax.block_until_ready(
        forecasting_loss(truth, pred, decouple,
                         model_name="PredRNN-V2", decouple_loss_weight=0.1))
    ref3 = _reference(truth, pred, decouple, "PredRNN-V2", 0.1)
    assert jnp.allclose(out3, ref3, rtol=1e-5, atol=1e-3), (out3, ref3)

    print("KERNEL_OK")
</pallas_src>

<mosaic_0001>
module attributes {stable_mosaic.version = 11 : i64} {
  func.func @kernel(%arg0: i32, %arg1: i32, %arg2: memref<24x256xf32, #tpu.memory_space<vmem>>, %arg3: memref<24x256xf32, #tpu.memory_space<vmem>>, %arg4: memref<24x256xf32, #tpu.memory_space<vmem>>) attributes {dimension_semantics = [#tpu.dimension_semantics<parallel>, #tpu.dimension_semantics<arbitrary>], iteration_bounds = array<i64: 1, 1>, scalar_prefetch = 0 : i64, scratch_operands = 0 : i64, tpu.core_type = #tpu.core_type<tc>, window_params = [{transform_indices = @transform_0, window_bounds = array<i64: 24, 256>}, {transform_indices = @transform_1, window_bounds = array<i64: 24, 256>}, {transform_indices = @transform_2, window_bounds = array<i64: 24, 256>}]} {
    %c0_i32 = arith.constant 0 : i32
    %0 = arith.cmpi eq, %arg1, %c0_i32 : i32
    %1 = arith.extui %0 : i1 to i32
    %c0_i32_0 = arith.constant 0 : i32
    %2 = arith.cmpi ne, %1, %c0_i32_0 : i32
    scf.if %2 {
      %cst = arith.constant 0.000000e+00 : f32
      %12 = vector.broadcast %cst : f32 to vector<24x256xf32>
      %c0_8 = arith.constant 0 : index
      %c0_9 = arith.constant 0 : index
      %13 = vector.load %arg4[%c0_8, %c0_9] : memref<24x256xf32, #tpu.memory_space<vmem>>, vector<24x256xf32>
      tpu.vector_store %arg4[%c0_8, %c0_9], %12 {strides = array<i32>} : memref<24x256xf32, #tpu.memory_space<vmem>>, vector<24x256xf32>,
    } else {
    }
    %c0 = arith.constant 0 : index
    %c0_1 = arith.constant 0 : index
    %3 = vector.load %arg2[%c0, %c0_1] : memref<24x256xf32, #tpu.memory_space<vmem>>, vector<24x256xf32>
    %c0_2 = arith.constant 0 : index
    %c0_3 = arith.constant 0 : index
    %4 = vector.load %arg3[%c0_2, %c0_3] : memref<24x256xf32, #tpu.memory_space<vmem>>, vector<24x256xf32>
    %5 = arith.subf %3, %4 : vector<24x256xf32>
    %6 = arith.mulf %5, %5 : vector<24x256xf32>
    %7 = math.absf %5 : vector<24x256xf32>
    %8 = arith.addf %6, %7 : vector<24x256xf32>
    %c0_4 = arith.constant 0 : index
    %c0_5 = arith.constant 0 : index
    %9 = vector.load %arg4[%c0_4, %c0_5] : memref<24x256xf32, #tpu.memory_space<vmem>>, vector<24x256xf32>
    %10 = arith.addf %9, %8 : vector<24x256xf32>
    %c0_6 = arith.constant 0 : index
    %c0_7 = arith.constant 0 : index
    %11 = vector.load %arg4[%c0_6, %c0_7] : memref<24x256xf32, #tpu.memory_space<vmem>>, vector<24x256xf32>
    tpu.vector_store %arg4[%c0_6, %c0_7], %10 {strides = array<i32>} : memref<24x256xf32, #tpu.memory_space<vmem>>, vector<24x256xf32>,
    return
  }
  func.func @transform_0(%arg0: i32, %arg1: i32) -> (i32, i32) {
    %c1_i32 = arith.constant 1 : i32
    %0 = arith.muli %arg0, %c1_i32 : i32
    %1 = arith.addi %0, %arg1 : i32
    %c0_i32 = arith.constant 0 : i32
    %2 = arith.minsi %1, %c0_i32 : i32
    %c0_i32_0 = arith.constant 0 : i32
    %c0_i32_1 = arith.constant 0 : i32
    return %2, %c0_i32_0 : i32, i32
  }
  func.func @transform_1(%arg0: i32, %arg1: i32) -> (i32, i32) {
    %c1_i32 = arith.constant 1 : i32
    %0 = arith.muli %arg0, %c1_i32 : i32
    %1 = arith.addi %0, %arg1 : i32
    %c0_i32 = arith.constant 0 : i32
    %2 = arith.minsi %1, %c0_i32 : i32
    %c0_i32_0 = arith.constant 0 : i32
    %c0_i32_1 = arith.constant 0 : i32
    return %2, %c0_i32_0 : i32, i32
  }
  func.func @transform_2(%arg0: i32, %arg1: i32) -> (i32, i32) {
    %c0_i32 = arith.constant 0 : i32
    %c0_i32_0 = arith.constant 0 : i32
    return %arg0, %c0_i32 : i32, i32
  }
}

</mosaic_0001>

<llo_original>
// kernel: tpu_custom_call.1
$region0: #{tpu_custom_call.1}
  #allocation0 [shape = 'u32[]', space=smem, size = 0x4, offset = 0x4, fixed_abs, tag = 'smem constant byte address 0x4 - core index']
  #allocation1 [shape = 'u32[144,128]{1,0:T(1,128)}', space=vmem, size = 0x12000, scoped, tag = 'internal scratch']
  %s0 = inlined_call_operand.hbm [shape: f32[24,256], index: 0, kind: input, shape index: {}]
  %s1 = inlined_call_operand.hbm [shape: f32[24,256], index: 1, kind: input, shape index: {}]
  %s2 = inlined_call_operand.hbm [shape: f32[24,256], index: 2, kind: output, shape index: {}]
  %s3 = sld [smem:[#allocation0]]
  $region30: #{tpu_custom_call.1} parent=0
    _
  %s5 = ssub.s32 1, %s3
  %s6 = scalar_select 0, %s5, %s3
  $region1: #{tpu_custom_call.1} parent=0
    #allocation2 [shape = 'u8[24576]{0}', space=vmem, size = 0x6000, scoped, tag = 'input window, operand 0, single buffered']
    #allocation3 [shape = 's32[1]{0}', space=sflag, size = 0x4, scoped, tag = 'scoped memory for tpu_custom_call.1']
    #allocation4 [shape = 's32[1]{0}', space=sflag, size = 0x4, scoped, tag = 'scoped memory for tpu_custom_call.1']
    #allocation5 [shape = 'u8[24576]{0}', space=vmem, size = 0x6000, scoped, tag = 'input window, operand 1, single buffered']
    #allocation6 [shape = 's32[1]{0}', space=sflag, size = 0x4, scoped, tag = 'scoped memory for tpu_custom_call.1']
    #allocation7 [shape = 'u8[24576]{0}', space=vmem, size = 0x6000, scoped, tag = 'output window, operand 0, single buffered']
    %7 = vsyncpa [#allocation3], 0
    %8 = vsyncpa [#allocation6], 0
    %9 = vsyncpa [#allocation4], 0
    // Predicated region
    $region2: #{tpu_custom_call.1} parent=1 // pred_check
      _
    $region3: #{tpu_custom_call.1} parent=1 // pred_check_branch
      %11 = sbr.rel (0) target = $region5
    $region4: #{tpu_custom_call.1} parent=1 // pred_region
      %s12 = sadd.s32 0, 0
      %p13 = scmp.lt.s32.totalorder %s12, 0
      %s14 = scalar_select %p13, %s12, 0
      %s15 = smul.u32 3, %s14
      %s17 = ssub.s32 768, 768
      %18 = vsyncadd [#allocation3], %s17
      %s19 = smul.addr %s15, 2
      %s20 = smul.addr %s19, 128
      %s21 = scalar_lea.hbm %s0, %s20
      %s22 = sshll.u32 [#allocation2], 4
      %s23 = int_to_ptr.vmem [resolvable:$true] %s22
      %28 = dma.hbm_to_vmem [thread:$0]  %s21, 768, %s23, [#allocation3], 256, 256, 16
    $region5: #{tpu_custom_call.1} parent=1 // pred_fallthru
      _
    // Predicated region
    $region6: #{tpu_custom_call.1} parent=1 // pred_check
      _
    $region7: #{tpu_custom_call.1} parent=1 // pred_check_branch
      %30 = sbr.rel (0) target = $region9
    $region8: #{tpu_custom_call.1} parent=1 // pred_region
      %s31 = sadd.s32 0, 0
      %p32 = scmp.lt.s32.totalorder %s31, 0
      %s33 = scalar_select %p32, %s31, 0
      %s34 = smul.u32 3, %s33
      %s36 = ssub.s32 768, 768
      %37 = vsyncadd [#allocation6], %s36
      %s38 = smul.addr %s34, 2
      %s39 = smul.addr %s38, 128
      %s40 = scalar_lea.hbm %s1, %s39
      %s41 = sshll.u32 [#allocation5], 4
      %s42 = int_to_ptr.vmem [resolvable:$true] %s41
      %47 = dma.hbm_to_vmem [thread:$0]  %s40, 768, %s42, [#allocation6], 256, 256, 16
    $region9: #{tpu_custom_call.1} parent=1 // pred_fallthru
      _
    // Predicated region
    $region10: #{tpu_custom_call.1} parent=1 // pred_check
      _
    $region11: #{tpu_custom_call.1} parent=1 // pred_check_branch
      %49 = sbr.rel (0) target = $region13
    $region12: #{tpu_custom_call.1} parent=1 // pred_region
      %50 = dma.done [#allocation3], 768
    $region13: #{tpu_custom_call.1} parent=1 // pred_fallthru
      _
    // Predicated region
    $region14: #{tpu_custom_call.1} parent=1 // pred_check
      _
    $region15: #{tpu_custom_call.1} parent=1 // pred_check_branch
      %52 = sbr.rel (0) target = $region17
    $region16: #{tpu_custom_call.1} parent=1 // pred_region
      %53 = dma.done [#allocation6], 768
    $region17: #{tpu_custom_call.1} parent=1 // pred_fallthru
      _
    %s54 = sadd.s32 0, 0
    %p55 = scmp.lt.s32.totalorder %s54, 0
    %s56 = scalar_select %p55, %s54, 0
    %s57 = smul.u32 3, %s56
    %s58 = sadd.s32 0, 0
    %p59 = scmp.lt.s32.totalorder %s58, 0
    %s60 = scalar_select %p59, %s58, 0
    %s61 = smul.u32 3, %s60
    %p62 = scmp.eq.s32.totalorder 0, 0
    // Predicated region
    $region18: #{tpu_custom_call.1} parent=1 // pred_check
      %p63 = pneg %p62
    $region19: #{tpu_custom_call.1} parent=1 // pred_check_branch
      %65 = sbr.rel (%p63) target = $region21
    $region20: #{tpu_custom_call.1} parent=1 // pred_region
      %66 = vst [vmem:[#allocation7] sm:$0xff] 0.0
      %67 = vst [vmem:[#allocation7 + $0x8] sm:$0xff] 0.0
      %68 = vst [vmem:[#allocation7 + $0x10] sm:$0xff] 0.0
      %69 = vst [vmem:[#allocation7 + $0x18] sm:$0xff] 0.0
      %70 = vst [vmem:[#allocation7 + $0x20] sm:$0xff] 0.0
      %71 = vst [vmem:[#allocation7 + $0x28] sm:$0xff] 0.0
    $region21: #{tpu_custom_call.1} parent=1 // pred_fallthru
      _
    %v72 = vld [vmem:[#allocation2] sm:$0xff]
    %v73 = vld [vmem:[#allocation2 + $0x8] sm:$0xff]
    %v74 = vld [vmem:[#allocation2 + $0x10] sm:$0xff]
    %v75 = vld [vmem:[#allocation2 + $0x18] sm:$0xff]
    %v76 = vld [vmem:[#allocation2 + $0x20] sm:$0xff]
    %v77 = vld [vmem:[#allocation2 + $0x28] sm:$0xff]
    %v78 = vld [vmem:[#allocation5] sm:$0xff]
    %v79 = vld [vmem:[#allocation5 + $0x8] sm:$0xff]
    %v80 = vld [vmem:[#allocation5 + $0x10] sm:$0xff]
    %v81 = vld [vmem:[#allocation5 + $0x18] sm:$0xff]
    %v82 = vld [vmem:[#allocation5 + $0x20] sm:$0xff]
    %v83 = vld [vmem:[#allocation5 + $0x28] sm:$0xff]
    %v84 = vsub.f32 %v72, %v78
    %v85 = vsub.f32 %v73, %v79
    %v86 = vsub.f32 %v74, %v80
    %v87 = vsub.f32 %v75, %v81
    %v88 = vsub.f32 %v76, %v82
    %v89 = vsub.f32 %v77, %v83
    %v90 = vmul.f32 %v84, %v84
    %v91 = vmul.f32 %v85, %v85
    %v92 = vmul.f32 %v86, %v86
    %v93 = vmul.f32 %v87, %v87
    %v94 = vmul.f32 %v88, %v88
    %v95 = vmul.f32 %v89, %v89
    %v96 = vand.u32 2147483647, %v84
    %v97 = vand.u32 2147483647, %v85
    %v98 = vand.u32 2147483647, %v86
    %v99 = vand.u32 2147483647, %v87
    %v100 = vand.u32 2147483647, %v88
    %v101 = vand.u32 2147483647, %v89
    %v102 = vadd.f32 %v90, %v96
    %v103 = vadd.f32 %v91, %v97
    %v104 = vadd.f32 %v92, %v98
    %v105 = vadd.f32 %v93, %v99
    %v106 = vadd.f32 %v94, %v100
    %v107 = vadd.f32 %v95, %v101
    %v108 = vld [vmem:[#allocation7] sm:$0xff]
    %v109 = vld [vmem:[#allocation7 + $0x8] sm:$0xff]
    %v110 = vld [vmem:[#allocation7 + $0x10] sm:$0xff]
    %v111 = vld [vmem:[#allocation7 + $0x18] sm:$0xff]
    %v112 = vld [vmem:[#allocation7 + $0x20] sm:$0xff]
    %v113 = vld [vmem:[#allocation7 + $0x28] sm:$0xff]
    %v114 = vadd.f32 %v108, %v102
    %v115 = vadd.f32 %v109, %v103
    %v116 = vadd.f32 %v110, %v104
    %v117 = vadd.f32 %v111, %v105
    %v118 = vadd.f32 %v112, %v106
    %v119 = vadd.f32 %v113, %v107
    %120 = vst [vmem:[#allocation7] sm:$0xff] %v114
    %121 = vst [vmem:[#allocation7 + $0x8] sm:$0xff] %v115
    %122 = vst [vmem:[#allocation7 + $0x10] sm:$0xff] %v116
    %123 = vst [vmem:[#allocation7 + $0x18] sm:$0xff] %v117
    %124 = vst [vmem:[#allocation7 + $0x20] sm:$0xff] %v118
    %125 = vst [vmem:[#allocation7 + $0x28] sm:$0xff] %v119
    // Predicated region
    $region22: #{tpu_custom_call.1} parent=1 // pred_check
      _
    $region23: #{tpu_custom_call.1} parent=1 // pred_check_branch
      %127 = sbr.rel (0) target = $region25
    $region24: #{tpu_custom_call.1} parent=1 // pred_region
      %s129 = ssub.s32 768, 768
      %130 = vsyncadd [#allocation4], %s129
      %s131 = sshll.u32 [#allocation7], 4
      %s132 = int_to_ptr.vmem [resolvable:$true] %s131
      %137 = dma.vmem_to_hbm [thread:$0]  %s132, 768, %s2, [#allocation4], 256, 256, 16
    $region25: #{tpu_custom_call.1} parent=1 // pred_fallthru
      _
    // Predicated region
    $region26: #{tpu_custom_call.1} parent=1 // pred_check
      _
    $region27: #{tpu_custom_call.1} parent=1 // pred_check_branch
      %139 = sbr.rel (0) target = $region29
    $region28: #{tpu_custom_call.1} parent=1 // pred_region
      %140 = dma.done [#allocation4], 768
    $region29: #{tpu_custom_call.1} parent=1 // pred_fallthru
      _
    %141 = vsyncpa [#allocation3], 1
    %142 = vsyncpa [#allocation6], 1
    %143 = vsyncpa [#allocation4], 1

</llo_original>
